<compile_context>
chip_gen: v5e
topology: v5e:2x2
jax: 0.10.0
libtpu: 0.0.40
codegen_flags: <defaults>
</compile_context>

<pallas_src>
import functools

import jax
import jax.numpy as jnp
from jax.experimental import pallas as pl
from jax.experimental.pallas import tpu as pltpu

LOG_STD_MAX = 2.0
LOG_STD_MIN = -20.0

# Cached capability flag: whether the lane-dense packed-I/O kernel variant lowers on
# this jax/libtpu (it needs in-kernel (tb, F) <-> (tb/8, 8F) relayout reshapes).
# Flipped to False automatically on the first lowering failure.
_PACKED_IO_OK = True


def actor_kernel(x_ref,
                 w1_ref, b1_ref,
                 w2_ref, b2_ref,
                 w3_ref, b3_ref,
                 out_ref,
                 *, packed_io):
    """Fused 3-layer MLP + (mean | std) head for one batch tile.

    MXU operands are bf16 (input cast in-kernel, weights pre-cast at init);
    accumulation and all post-matmul math (bias, ReLU, clip, exp) are f32.
    """
    S = w1_ref.shape[0]
    A2 = w3_ref.shape[1]

    if packed_io:
        rows = x_ref.shape[0]                    # tb // 8 packed rows
        tb = rows * 8
        # lane-dense packed input tile -> logical (tb, S); cast to bf16 in-kernel
        x = x_ref[...].reshape(tb, S).astype(jnp.bfloat16)
    else:
        x = x_ref[...].astype(jnp.bfloat16)      # (tb, S)

    # hidden layer 1: ReLU(x @ W1 + b1)
    h1 = jnp.dot(x, w1_ref[...], preferred_element_type=jnp.float32) + b1_ref[...]
    h1 = jnp.maximum(h1, 0.0)

    # hidden layer 2: ReLU(h1 @ W2 + b2)
    h2 = jnp.dot(h1.astype(w2_ref.dtype), w2_ref[...],
                 preferred_element_type=jnp.float32) + b2_ref[...]
    h2 = jnp.maximum(h2, 0.0)

    # fused output head: [mean | log_std] in one matmul -> (tb, 2A) f32
    out = jnp.dot(h2.astype(w3_ref.dtype), w3_ref[...],
                  preferred_element_type=jnp.float32) + b3_ref[...]

    a = A2 // 2
    cols = jax.lax.broadcasted_iota(jnp.int32, out.shape, 1)
    # exp(clip(.)) is bounded (<= e^2) so evaluating it on the mean half too is safe;
    # the where keeps the mean half untouched. exp runs on the EUP (free slot).
    std = jnp.exp(jnp.clip(out, LOG_STD_MIN, LOG_STD_MAX))
    result = jnp.where(cols >= a, std, out)

    if packed_io:
        # lane-dense packed store: (tb, 2A) -> (tb/8, 8*2A) slab (unmasked vst + dense DMA)
        out_ref[...] = result.reshape(out_ref.shape).astype(out_ref.dtype)
    else:
        out_ref[...] = result.astype(out_ref.dtype)


def actor_forward(state, params, *, batch_tile=2048):
    """Pallas wrapper: batch-tiled f32 input, resident bf16 weights, (mean, std) out."""
    global _PACKED_IO_OK
    w1, b1, w2, b2, w3, b3 = params
    B, S = state.shape
    H1 = w1.shape[1]
    H2 = w2.shape[1]
    A2 = w3.shape[1]            # 2 * action_dim
    A = A2 // 2

    # Pad the batch to a multiple of 8 so the packed (B, F) <-> (B/8, 8F) views are
    # pure metadata reshapes (no copy) and the wrapper un-pack stays copy-free.
    B_pad = ((B + 7) // 8) * 8
    x = state if B_pad == B else jnp.pad(state, ((0, B_pad - B), (0, 0)))

    # One tile whenever the whole batch fits (per-step overhead dominates this tiny
    # MLP; single-TC v5e/v6e gain nothing from extra steps). Larger batches tile at
    # `batch_tile` rows; the resulting "parallel" grid steps shard across v7x's 2 TCs.
    if B_pad <= batch_tile:
        tb = B_pad
    else:
        tb = max(64, (batch_tile // 64) * 64)    # keep tb/8 a multiple of 8 sublanes
    grid = (pl.cdiv(B_pad, tb),)

    # Weights are stored bf16 (cast once at init); cast here only as a fallback.
    cast_w = lambda w: w if w.dtype == jnp.bfloat16 else w.astype(jnp.bfloat16)
    weights = (cast_w(w1), b1, cast_w(w2), b2, cast_w(w3), b3)
    weight_specs = [
        pl.BlockSpec((S, H1), lambda i: (0, 0)),      # W1 (VMEM-resident, ~13 KB total)
        pl.BlockSpec((1, H1), lambda i: (0, 0)),      # b1
        pl.BlockSpec((H1, H2), lambda i: (0, 0)),     # W2
        pl.BlockSpec((1, H2), lambda i: (0, 0)),      # b2
        pl.BlockSpec((H2, A2), lambda i: (0, 0)),     # W3 (fused mean|log_std head)
        pl.BlockSpec((1, A2), lambda i: (0, 0)),      # b3
    ]

    def run(packed_io):
        if packed_io:
            x_in = x.reshape(B_pad // 8, 8 * S)       # free row-major metadata reshape
            in0 = pl.BlockSpec((tb // 8, 8 * S), lambda i: (i, 0))
            out_spec = pl.BlockSpec((tb // 8, 8 * A2), lambda i: (i, 0))
            out_shape = jax.ShapeDtypeStruct((B_pad // 8, 8 * A2), jnp.float32)
        else:
            x_in = x
            in0 = pl.BlockSpec((tb, S), lambda i: (i, 0))
            out_spec = pl.BlockSpec((tb, A2), lambda i: (i, 0))
            out_shape = jax.ShapeDtypeStruct((B_pad, A2), jnp.float32)

        out = pl.pallas_call(
            functools.partial(actor_kernel, packed_io=packed_io),
            grid=grid,
            in_specs=[in0] + weight_specs,
            out_specs=out_spec,
            out_shape=out_shape,
            compiler_params=pltpu.CompilerParams(
                dimension_semantics=("parallel",)),
        )(x_in, *weights)
        return out.reshape(B_pad, A2) if packed_io else out

    if _PACKED_IO_OK:
        try:
            out = run(packed_io=True)
        except Exception:
            # Mosaic on this jax/libtpu can't lower the in-kernel relayout reshapes;
            # fall back (and remember) to the plain (B, F) layout so we always run.
            _PACKED_IO_OK = False
            out = run(packed_io=False)
    else:
        out = run(packed_io=False)

    out = out[:B]
    # split the fused (mean | std) slab outside the kernel (== torch.chunk semantics)
    # TODO(synk): emit bf16 (at least for std) if downstream tolerates it — halves the
    # store bytes, but changes numerics vs. the f32 PyTorch reference, so kept f32.
    return out[:, :A], out[:, A:]


def init_actor_params(key, state_dim, action_dim, hidden=(64, 64)):
    """Deterministic synthetic init (PyTorch-style uniform fan-in scaling).

    Weights are stored transposed (in_dim, out_dim) and pre-cast to bf16 ONCE
    (MXU-native operand dtype, avoids per-call cast kernels); biases stay f32.
    The final layer stays fused as a single (H2, 2*action_dim) weight — exactly the
    nn.Linear(64, 2A) of the reference module.
    """
    dims = [state_dim] + list(hidden) + [2 * action_dim]
    keys = jax.random.split(key, 2 * (len(dims) - 1))
    params = []
    for li in range(len(dims) - 1):
        bound = float(dims[li]) ** -0.5
        w = jax.random.uniform(keys[2 * li], (dims[li], dims[li + 1]),
                               jnp.float32, -bound, bound)
        b = jax.random.uniform(keys[2 * li + 1], (1, dims[li + 1]),
                               jnp.float32, -bound, bound)
        params += [w.astype(jnp.bfloat16), b]
    return tuple(params)


def actor_reference(state, params):
    """Plain-JAX reference using the same bf16-rounded matmul operands as the kernel."""
    w1, b1, w2, b2, w3, b3 = params
    bf = lambda t: t.astype(jnp.bfloat16).astype(jnp.float32)
    f32 = lambda t: t.astype(jnp.float32)
    h1 = jnp.maximum(bf(state) @ f32(w1) + b1, 0.0)
    h2 = jnp.maximum(bf(h1) @ f32(w2) + b2, 0.0)
    out = bf(h2) @ f32(w3) + b3
    A = w3.shape[1] // 2
    mean = out[:, :A]
    log_std = jnp.clip(out[:, A:], LOG_STD_MIN, LOG_STD_MAX)
    return mean, jnp.exp(log_std)


if __name__ == "__main__":
    key = jax.random.PRNGKey(0)
    k_param, k_small, k_odd, k_big = jax.random.split(key, 4)

    state_dim = 16
    action_dim = 8
    params = init_actor_params(k_param, state_dim, action_dim)

    # small smoke test (single grid step, single packed row-block)
    state = jax.random.normal(k_small, (8, state_dim), jnp.float32)
    mean, std = jax.block_until_ready(actor_forward(state, params))
    ref_mean, ref_std = actor_reference(state, params)
    assert jnp.allclose(mean, ref_mean, atol=1e-4, rtol=1e-4), "mean mismatch (small)"
    assert jnp.allclose(std, ref_std, atol=1e-4, rtol=1e-4), "std mismatch (small)"

    # batch not a multiple of 8: exercises the pad + un-pad path
    odd_state = jax.random.normal(k_odd, (37, state_dim), jnp.float32)
    omean, ostd = jax.block_until_ready(actor_forward(odd_state, params))
    oref_mean, oref_std = actor_reference(odd_state, params)
    assert jnp.allclose(omean, oref_mean, atol=1e-4, rtol=1e-4), "mean mismatch (odd)"
    assert jnp.allclose(ostd, oref_std, atol=1e-4, rtol=1e-4), "std mismatch (odd)"

    # larger batch, default tile: single big batch tile (no forced grid split)
    big_state = jax.random.normal(k_big, (1000, state_dim), jnp.float32)
    bmean, bstd = jax.block_until_ready(actor_forward(big_state, params))
    bref_mean, bref_std = actor_reference(big_state, params)
    assert jnp.allclose(bmean, bref_mean, atol=1e-4, rtol=1e-4), "mean mismatch (large)"
    assert jnp.allclose(bstd, bref_std, atol=1e-4, rtol=1e-4), "std mismatch (large)"

    # same batch with a small tile: multi-step "parallel" grid + partial last tile
    tmean, tstd = jax.block_until_ready(
        actor_forward(big_state, params, batch_tile=256))
    assert jnp.allclose(tmean, bref_mean, atol=1e-4, rtol=1e-4), "mean mismatch (tiled)"
    assert jnp.allclose(tstd, bref_std, atol=1e-4, rtol=1e-4), "std mismatch (tiled)"

    print("KERNEL_OK")
</pallas_src>

<mosaic_0001>
module attributes {stable_mosaic.version = 11 : i64} {
  func.func @actor_kernel(%arg0: i32, %arg1: memref<1x128xf32, #tpu.memory_space<vmem>>, %arg2: memref<16x64xbf16, #tpu.memory_space<vmem>>, %arg3: memref<1x64xf32, #tpu.memory_space<vmem>>, %arg4: memref<64x64xbf16, #tpu.memory_space<vmem>>, %arg5: memref<1x64xf32, #tpu.memory_space<vmem>>, %arg6: memref<64x16xbf16, #tpu.memory_space<vmem>>, %arg7: memref<1x16xf32, #tpu.memory_space<vmem>>, %arg8: memref<1x128xf32, #tpu.memory_space<vmem>>) attributes {dimension_semantics = [#tpu.dimension_semantics<parallel>], iteration_bounds = array<i64: 1>, scalar_prefetch = 0 : i64, scratch_operands = 0 : i64, tpu.core_type = #tpu.core_type<tc>, window_params = [{transform_indices = @transform_0, window_bounds = array<i64: 1, 128>}, {pipeline_mode = #tpu.pipeline_mode<synchronous>, transform_indices = @transform_1, window_bounds = array<i64: 16, 64>}, {pipeline_mode = #tpu.pipeline_mode<synchronous>, transform_indices = @transform_2, window_bounds = array<i64: 1, 64>}, {pipeline_mode = #tpu.pipeline_mode<synchronous>, transform_indices = @transform_3, window_bounds = array<i64: 64, 64>}, {pipeline_mode = #tpu.pipeline_mode<synchronous>, transform_indices = @transform_4, window_bounds = array<i64: 1, 64>}, {pipeline_mode = #tpu.pipeline_mode<synchronous>, transform_indices = @transform_5, window_bounds = array<i64: 64, 16>}, {pipeline_mode = #tpu.pipeline_mode<synchronous>, transform_indices = @transform_6, window_bounds = array<i64: 1, 16>}, {transform_indices = @transform_7, window_bounds = array<i64: 1, 128>}]} {
    %c0 = arith.constant 0 : index
    %c0_0 = arith.constant 0 : index
    %0 = vector.load %arg1[%c0, %c0_0] : memref<1x128xf32, #tpu.memory_space<vmem>>, vector<1x128xf32>
    %1 = vector.shape_cast %0 : vector<1x128xf32> to vector<8x16xf32>
    %2 = arith.truncf %1 : vector<8x16xf32> to vector<8x16xbf16>
    %c0_1 = arith.constant 0 : index
    %c0_2 = arith.constant 0 : index
    %3 = vector.load %arg2[%c0_1, %c0_2] : memref<16x64xbf16, #tpu.memory_space<vmem>>, vector<16x64xbf16>
    %cst = arith.constant dense<0.000000e+00> : vector<8x64xf32>
    %4 = tpu.matmul %2, %3, %cst {dimension_numbers = #tpu.dot_dimension_numbers<[1], [0], [0], [1], [0, 0, 1, 1], [], []>} : vector<8x16xbf16>, vector<16x64xbf16>, vector<8x64xf32> -> vector<8x64xf32>
    %c0_3 = arith.constant 0 : index
    %c0_4 = arith.constant 0 : index
    %5 = vector.load %arg3[%c0_3, %c0_4] : memref<1x64xf32, #tpu.memory_space<vmem>>, vector<1x64xf32>
    %6 = vector.broadcast %5 : vector<1x64xf32> to vector<8x64xf32>
    %7 = arith.addf %4, %6 : vector<8x64xf32>
    %cst_5 = arith.constant 0.000000e+00 : f32
    %8 = vector.broadcast %cst_5 : f32 to vector<8x64xf32>
    %9 = arith.maximumf %7, %8 : vector<8x64xf32>
    %10 = arith.truncf %9 : vector<8x64xf32> to vector<8x64xbf16>
    %c0_6 = arith.constant 0 : index
    %c0_7 = arith.constant 0 : index
    %11 = vector.load %arg4[%c0_6, %c0_7] : memref<64x64xbf16, #tpu.memory_space<vmem>>, vector<64x64xbf16>
    %cst_8 = arith.constant dense<0.000000e+00> : vector<8x64xf32>
    %12 = tpu.matmul %10, %11, %cst_8 {dimension_numbers = #tpu.dot_dimension_numbers<[1], [0], [0], [1], [0, 0, 1, 1], [], []>} : vector<8x64xbf16>, vector<64x64xbf16>, vector<8x64xf32> -> vector<8x64xf32>
    %c0_9 = arith.constant 0 : index
    %c0_10 = arith.constant 0 : index
    %13 = vector.load %arg5[%c0_9, %c0_10] : memref<1x64xf32, #tpu.memory_space<vmem>>, vector<1x64xf32>
    %14 = vector.broadcast %13 : vector<1x64xf32> to vector<8x64xf32>
    %15 = arith.addf %12, %14 : vector<8x64xf32>
    %cst_11 = arith.constant 0.000000e+00 : f32
    %16 = vector.broadcast %cst_11 : f32 to vector<8x64xf32>
    %17 = arith.maximumf %15, %16 : vector<8x64xf32>
    %18 = arith.truncf %17 : vector<8x64xf32> to vector<8x64xbf16>
    %c0_12 = arith.constant 0 : index
    %c0_13 = arith.constant 0 : index
    %19 = vector.load %arg6[%c0_12, %c0_13] : memref<64x16xbf16, #tpu.memory_space<vmem>>, vector<64x16xbf16>
    %cst_14 = arith.constant dense<0.000000e+00> : vector<8x16xf32>
    %20 = tpu.matmul %18, %19, %cst_14 {dimension_numbers = #tpu.dot_dimension_numbers<[1], [0], [0], [1], [0, 0, 1, 1], [], []>} : vector<8x64xbf16>, vector<64x16xbf16>, vector<8x16xf32> -> vector<8x16xf32>
    %c0_15 = arith.constant 0 : index
    %c0_16 = arith.constant 0 : index
    %21 = vector.load %arg7[%c0_15, %c0_16] : memref<1x16xf32, #tpu.memory_space<vmem>>, vector<1x16xf32>
    %22 = vector.broadcast %21 : vector<1x16xf32> to vector<8x16xf32>
    %23 = arith.addf %20, %22 : vector<8x16xf32>
    %24 = tpu.iota {dimensions = array<i32: 1>} : vector<8x16xi32>
    %cst_17 = arith.constant -2.000000e+01 : f32
    %cst_18 = arith.constant 2.000000e+00 : f32
    %25 = vector.broadcast %cst_17 : f32 to vector<8x16xf32>
    %26 = arith.maximumf %25, %23 : vector<8x16xf32>
    %27 = vector.broadcast %cst_18 : f32 to vector<8x16xf32>
    %28 = arith.minimumf %27, %26 : vector<8x16xf32>
    %29 = math.exp %28 : vector<8x16xf32>
    %c8_i32 = arith.constant 8 : i32
    %30 = vector.broadcast %c8_i32 : i32 to vector<8x16xi32>
    %31 = arith.cmpi sge, %24, %30 : vector<8x16xi32>
    %32 = arith.select %31, %29, %23 : vector<8x16xi1>, vector<8x16xf32>
    %33 = vector.shape_cast %32 : vector<8x16xf32> to vector<1x128xf32>
    %c0_19 = arith.constant 0 : index
    %c0_20 = arith.constant 0 : index
    %34 = vector.load %arg8[%c0_19, %c0_20] : memref<1x128xf32, #tpu.memory_space<vmem>>, vector<1x128xf32>
    tpu.vector_store %arg8[%c0_19, %c0_20], %33 {strides = array<i32>} : memref<1x128xf32, #tpu.memory_space<vmem>>, vector<1x128xf32>,
    return
  }
  func.func @transform_0(%arg0: i32) -> (i32, i32) {
    %c0_i32 = arith.constant 0 : i32
    %c0_i32_0 = arith.constant 0 : i32
    return %arg0, %c0_i32 : i32, i32
  }
  func.func @transform_1(%arg0: i32) -> (i32, i32) {
    %c0_i32 = arith.constant 0 : i32
    %c0_i32_0 = arith.constant 0 : i32
    %c0_i32_1 = arith.constant 0 : i32
    return %c0_i32, %c0_i32_0 : i32, i32
  }
  func.func @transform_2(%arg0: i32) -> (i32, i32) {
    %c0_i32 = arith.constant 0 : i32
    %c0_i32_0 = arith.constant 0 : i32
    %c0_i32_1 = arith.constant 0 : i32
    return %c0_i32, %c0_i32_0 : i32, i32
  }
  func.func @transform_3(%arg0: i32) -> (i32, i32) {
    %c0_i32 = arith.constant 0 : i32
    %c0_i32_0 = arith.constant 0 : i32
    %c0_i32_1 = arith.constant 0 : i32
    return %c0_i32, %c0_i32_0 : i32, i32
  }
  func.func @transform_4(%arg0: i32) -> (i32, i32) {
    %c0_i32 = arith.constant 0 : i32
    %c0_i32_0 = arith.constant 0 : i32
    %c0_i32_1 = arith.constant 0 : i32
    return %c0_i32, %c0_i32_0 : i32, i32
  }
  func.func @transform_5(%arg0: i32) -> (i32, i32) {
    %c0_i32 = arith.constant 0 : i32
    %c0_i32_0 = arith.constant 0 : i32
    %c0_i32_1 = arith.constant 0 : i32
    return %c0_i32, %c0_i32_0 : i32, i32
  }
  func.func @transform_6(%arg0: i32) -> (i32, i32) {
    %c0_i32 = arith.constant 0 : i32
    %c0_i32_0 = arith.constant 0 : i32
    %c0_i32_1 = arith.constant 0 : i32
    return %c0_i32, %c0_i32_0 : i32, i32
  }
  func.func @transform_7(%arg0: i32) -> (i32, i32) {
    %c0_i32 = arith.constant 0 : i32
    %c0_i32_0 = arith.constant 0 : i32
    return %arg0, %c0_i32 : i32, i32
  }
}

module attributes {stable_mosaic.version = 11 : i64} {
  func.func @actor_kernel(%arg0: i32, %arg1: memref<8x16xf32, #tpu.memory_space<vmem>>, %arg2: memref<16x64xbf16, #tpu.memory_space<vmem>>, %arg3: memref<1x64xf32, #tpu.memory_space<vmem>>, %arg4: memref<64x64xbf16, #tpu.memory_space<vmem>>, %arg5: memref<1x64xf32, #tpu.memory_space<vmem>>, %arg6: memref<64x16xbf16, #tpu.memory_space<vmem>>, %arg7: memref<1x16xf32, #tpu.memory_space<vmem>>, %arg8: memref<8x16xf32, #tpu.memory_space<vmem>>) attributes {dimension_semantics = [#tpu.dimension_semantics<parallel>], iteration_bounds = array<i64: 1>, scalar_prefetch = 0 : i64, scratch_operands = 0 : i64, tpu.core_type = #tpu.core_type<tc>, window_params = [{transform_indices = @transform_0, window_bounds = array<i64: 8, 16>}, {pipeline_mode = #tpu.pipeline_mode<synchronous>, transform_indices = @transform_1, window_bounds = array<i64: 16, 64>}, {pipeline_mode = #tpu.pipeline_mode<synchronous>, transform_indices = @transform_2, window_bounds = array<i64: 1, 64>}, {pipeline_mode = #tpu.pipeline_mode<synchronous>, transform_indices = @transform_3, window_bounds = array<i64: 64, 64>}, {pipeline_mode = #tpu.pipeline_mode<synchronous>, transform_indices = @transform_4, window_bounds = array<i64: 1, 64>}, {pipeline_mode = #tpu.pipeline_mode<synchronous>, transform_indices = @transform_5, window_bounds = array<i64: 64, 16>}, {pipeline_mode = #tpu.pipeline_mode<synchronous>, transform_indices = @transform_6, window_bounds = array<i64: 1, 16>}, {transform_indices = @transform_7, window_bounds = array<i64: 8, 16>}]} {
    %c0 = arith.constant 0 : index
    %c0_0 = arith.constant 0 : index
    %0 = vector.load %arg1[%c0, %c0_0] : memref<8x16xf32, #tpu.memory_space<vmem>>, vector<8x16xf32>
    %1 = arith.truncf %0 : vector<8x16xf32> to vector<8x16xbf16>
    %c0_1 = arith.constant 0 : index
    %c0_2 = arith.constant 0 : index
    %2 = vector.load %arg2[%c0_1, %c0_2] : memref<16x64xbf16, #tpu.memory_space<vmem>>, vector<16x64xbf16>
    %cst = arith.constant dense<0.000000e+00> : vector<8x64xf32>
    %3 = tpu.matmul %1, %2, %cst {dimension_numbers = #tpu.dot_dimension_numbers<[1], [0], [0], [1], [0, 0, 1, 1], [], []>} : vector<8x16xbf16>, vector<16x64xbf16>, vector<8x64xf32> -> vector<8x64xf32>
    %c0_3 = arith.constant 0 : index
    %c0_4 = arith.constant 0 : index
    %4 = vector.load %arg3[%c0_3, %c0_4] : memref<1x64xf32, #tpu.memory_space<vmem>>, vector<1x64xf32>
    %5 = vector.broadcast %4 : vector<1x64xf32> to vector<8x64xf32>
    %6 = arith.addf %3, %5 : vector<8x64xf32>
    %cst_5 = arith.constant 0.000000e+00 : f32
    %7 = vector.broadcast %cst_5 : f32 to vector<8x64xf32>
    %8 = arith.maximumf %6, %7 : vector<8x64xf32>
    %9 = arith.truncf %8 : vector<8x64xf32> to vector<8x64xbf16>
    %c0_6 = arith.constant 0 : index
    %c0_7 = arith.constant 0 : index
    %10 = vector.load %arg4[%c0_6, %c0_7] : memref<64x64xbf16, #tpu.memory_space<vmem>>, vector<64x64xbf16>
    %cst_8 = arith.constant dense<0.000000e+00> : vector<8x64xf32>
    %11 = tpu.matmul %9, %10, %cst_8 {dimension_numbers = #tpu.dot_dimension_numbers<[1], [0], [0], [1], [0, 0, 1, 1], [], []>} : vector<8x64xbf16>, vector<64x64xbf16>, vector<8x64xf32> -> vector<8x64xf32>
    %c0_9 = arith.constant 0 : index
    %c0_10 = arith.constant 0 : index
    %12 = vector.load %arg5[%c0_9, %c0_10] : memref<1x64xf32, #tpu.memory_space<vmem>>, vector<1x64xf32>
    %13 = vector.broadcast %12 : vector<1x64xf32> to vector<8x64xf32>
    %14 = arith.addf %11, %13 : vector<8x64xf32>
    %cst_11 = arith.constant 0.000000e+00 : f32
    %15 = vector.broadcast %cst_11 : f32 to vector<8x64xf32>
    %16 = arith.maximumf %14, %15 : vector<8x64xf32>
    %17 = arith.truncf %16 : vector<8x64xf32> to vector<8x64xbf16>
    %c0_12 = arith.constant 0 : index
    %c0_13 = arith.constant 0 : index
    %18 = vector.load %arg6[%c0_12, %c0_13] : memref<64x16xbf16, #tpu.memory_space<vmem>>, vector<64x16xbf16>
    %cst_14 = arith.constant dense<0.000000e+00> : vector<8x16xf32>
    %19 = tpu.matmul %17, %18, %cst_14 {dimension_numbers = #tpu.dot_dimension_numbers<[1], [0], [0], [1], [0, 0, 1, 1], [], []>} : vector<8x64xbf16>, vector<64x16xbf16>, vector<8x16xf32> -> vector<8x16xf32>
    %c0_15 = arith.constant 0 : index
    %c0_16 = arith.constant 0 : index
    %20 = vector.load %arg7[%c0_15, %c0_16] : memref<1x16xf32, #tpu.memory_space<vmem>>, vector<1x16xf32>
    %21 = vector.broadcast %20 : vector<1x16xf32> to vector<8x16xf32>
    %22 = arith.addf %19, %21 : vector<8x16xf32>
    %23 = tpu.iota {dimensions = array<i32: 1>} : vector<8x16xi32>
    %cst_17 = arith.constant -2.000000e+01 : f32
    %cst_18 = arith.constant 2.000000e+00 : f32
    %24 = vector.broadcast %cst_17 : f32 to vector<8x16xf32>
    %25 = arith.maximumf %24, %22 : vector<8x16xf32>
    %26 = vector.broadcast %cst_18 : f32 to vector<8x16xf32>
    %27 = arith.minimumf %26, %25 : vector<8x16xf32>
    %28 = math.exp %27 : vector<8x16xf32>
    %c8_i32 = arith.constant 8 : i32
    %29 = vector.broadcast %c8_i32 : i32 to vector<8x16xi32>
    %30 = arith.cmpi sge, %23, %29 : vector<8x16xi32>
    %31 = arith.select %30, %28, %22 : vector<8x16xi1>, vector<8x16xf32>
    %c0_19 = arith.constant 0 : index
    %c0_20 = arith.constant 0 : index
    %32 = vector.load %arg8[%c0_19, %c0_20] : memref<8x16xf32, #tpu.memory_space<vmem>>, vector<8x16xf32>
    tpu.vector_store %arg8[%c0_19, %c0_20], %31 {strides = array<i32>} : memref<8x16xf32, #tpu.memory_space<vmem>>, vector<8x16xf32>,
    return
  }
  func.func @transform_0(%arg0: i32) -> (i32, i32) {
    %c0_i32 = arith.constant 0 : i32
    %c0_i32_0 = arith.constant 0 : i32
    return %arg0, %c0_i32 : i32, i32
  }
  func.func @transform_1(%arg0: i32) -> (i32, i32) {
    %c0_i32 = arith.constant 0 : i32
    %c0_i32_0 = arith.constant 0 : i32
    %c0_i32_1 = arith.constant 0 : i32
    return %c0_i32, %c0_i32_0 : i32, i32
  }
  func.func @transform_2(%arg0: i32) -> (i32, i32) {
    %c0_i32 = arith.constant 0 : i32
    %c0_i32_0 = arith.constant 0 : i32
    %c0_i32_1 = arith.constant 0 : i32
    return %c0_i32, %c0_i32_0 : i32, i32
  }
  func.func @transform_3(%arg0: i32) -> (i32, i32) {
    %c0_i32 = arith.constant 0 : i32
    %c0_i32_0 = arith.constant 0 : i32
    %c0_i32_1 = arith.constant 0 : i32
    return %c0_i32, %c0_i32_0 : i32, i32
  }
  func.func @transform_4(%arg0: i32) -> (i32, i32) {
    %c0_i32 = arith.constant 0 : i32
    %c0_i32_0 = arith.constant 0 : i32
    %c0_i32_1 = arith.constant 0 : i32
    return %c0_i32, %c0_i32_0 : i32, i32
  }
  func.func @transform_5(%arg0: i32) -> (i32, i32) {
    %c0_i32 = arith.constant 0 : i32
    %c0_i32_0 = arith.constant 0 : i32
    %c0_i32_1 = arith.constant 0 : i32
    return %c0_i32, %c0_i32_0 : i32, i32
  }
  func.func @transform_6(%arg0: i32) -> (i32, i32) {
    %c0_i32 = arith.constant 0 : i32
    %c0_i32_0 = arith.constant 0 : i32
    %c0_i32_1 = arith.constant 0 : i32
    return %c0_i32, %c0_i32_0 : i32, i32
  }
  func.func @transform_7(%arg0: i32) -> (i32, i32) {
    %c0_i32 = arith.constant 0 : i32
    %c0_i32_0 = arith.constant 0 : i32
    return %arg0, %c0_i32 : i32, i32
  }
}

</mosaic_0001>

<llo_original>
// kernel: tpu_custom_call.1
$region0: #{tpu_custom_call.1}
  #allocation0 [shape = 'u32[]', space=smem, size = 0x4, offset = 0x4, fixed_abs, tag = 'smem constant byte address 0x4 - core index']
  #allocation1 [shape = 'u32[72,128]{1,0:T(1,128)}', space=vmem, size = 0x9000, scoped, tag = 'internal scratch']
  %s0 = inlined_call_operand.vmem [shape: f32[8,16], index: 0, kind: input, shape index: {}]
  %s1 = inlined_call_operand.hbm [shape: bf16[16,64], index: 1, kind: input, shape index: {}]
  %s2 = inlined_call_operand.vmem [shape: f32[1,64], index: 2, kind: input, shape index: {}]
  %s3 = inlined_call_operand.vmem [shape: bf16[64,64], index: 3, kind: input, shape index: {}]
  %s4 = inlined_call_operand.vmem [shape: f32[1,64], index: 4, kind: input, shape index: {}]
  %s5 = inlined_call_operand.vmem [shape: bf16[64,16], index: 5, kind: input, shape index: {}]
  %s6 = inlined_call_operand.vmem [shape: f32[1,16], index: 6, kind: input, shape index: {}]
  %s7 = inlined_call_operand.hbm [shape: f32[8,16], index: 7, kind: output, shape index: {}]
  %s8 = sld [smem:[#allocation0]]
  $region42: #{tpu_custom_call.1} parent=0
    _
  %s10 = ssub.s32 1, %s8
  %s11 = scalar_select 0, %s10, %s8
  $region1: #{tpu_custom_call.1} parent=0
    #allocation2 [shape = 'u8[4096]{0}', space=vmem, size = 0x1000, scoped, tag = 'input window, operand 1, single buffered']
    #allocation3 [shape = 's32[1]{0}', space=sflag, size = 0x4, scoped, tag = 'scoped memory for tpu_custom_call.1']
    #allocation4 [shape = 's32[1]{0}', space=sflag, size = 0x4, scoped, tag = 'scoped memory for tpu_custom_call.1']
    #allocation5 [shape = 'u8[4096]{0}', space=vmem, size = 0x1000, scoped, tag = 'output window, operand 0, single buffered']
    %12 = vsyncpa [#allocation3], 0
    %13 = vsyncpa [#allocation4], 0
    // Predicated region
    $region2: #{tpu_custom_call.1} parent=1 // pred_check
      _
    $region3: #{tpu_custom_call.1} parent=1 // pred_check_branch
      %15 = sbr.rel (0) target = $region5
    $region4: #{tpu_custom_call.1} parent=1 // pred_region
      _
    $region5: #{tpu_custom_call.1} parent=1 // pred_fallthru
      _
    // Predicated region
    $region6: #{tpu_custom_call.1} parent=1 // pred_check
      _
    $region7: #{tpu_custom_call.1} parent=1 // pred_check_branch
      %17 = sbr.rel (0) target = $region9
    $region8: #{tpu_custom_call.1} parent=1 // pred_region
      %19 = vsyncadd [#allocation3], 0
      %s20 = sshll.u32 %s1, 4
      %s21 = int_to_ptr.hbm [resolvable:$true] %s20
      %s22 = sshll.u32 [#allocation2], 4
      %s23 = int_to_ptr.vmem [resolvable:$true] %s22
      %28 = dma.hbm_to_vmem [thread:$0]  %s21, 128, %s23, [#allocation3], 64, 64, 4
    $region9: #{tpu_custom_call.1} parent=1 // pred_fallthru
      _
    // Predicated region
    $region10: #{tpu_custom_call.1} parent=1 // pred_check
      _
    $region11: #{tpu_custom_call.1} parent=1 // pred_check_branch
      %30 = sbr.rel (0) target = $region13
    $region12: #{tpu_custom_call.1} parent=1 // pred_region
      _
    $region13: #{tpu_custom_call.1} parent=1 // pred_fallthru
      _
    // Predicated region
    $region14: #{tpu_custom_call.1} parent=1 // pred_check
      _
    $region15: #{tpu_custom_call.1} parent=1 // pred_check_branch
      %32 = sbr.rel (0) target = $region17
    $region16: #{tpu_custom_call.1} parent=1 // pred_region
      _
    $region17: #{tpu_custom_call.1} parent=1 // pred_fallthru
      _
    // Predicated region
    $region18: #{tpu_custom_call.1} parent=1 // pred_check
      _
    $region19: #{tpu_custom_call.1} parent=1 // pred_check_branch
      %34 = sbr.rel (0) target = $region21
    $region20: #{tpu_custom_call.1} parent=1 // pred_region
      _
    $region21: #{tpu_custom_call.1} parent=1 // pred_fallthru
      _
    // Predicated region
    $region22: #{tpu_custom_call.1} parent=1 // pred_check
      _
    $region23: #{tpu_custom_call.1} parent=1 // pred_check_branch
      %36 = sbr.rel (0) target = $region25
    $region24: #{tpu_custom_call.1} parent=1 // pred_region
      _
    $region25: #{tpu_custom_call.1} parent=1 // pred_fallthru
      _
    // Predicated region
    $region26: #{tpu_custom_call.1} parent=1 // pred_check
      _
    $region27: #{tpu_custom_call.1} parent=1 // pred_check_branch
      %38 = sbr.rel (0) target = $region29
    $region28: #{tpu_custom_call.1} parent=1 // pred_region
      _
    $region29: #{tpu_custom_call.1} parent=1 // pred_fallthru
      _
    // Predicated region
    $region30: #{tpu_custom_call.1} parent=1 // pred_check
      _
    $region31: #{tpu_custom_call.1} parent=1 // pred_check_branch
      %40 = sbr.rel (0) target = $region33
    $region32: #{tpu_custom_call.1} parent=1 // pred_region
      %42 = dma.done [#allocation3], 128
    $region33: #{tpu_custom_call.1} parent=1 // pred_fallthru
      _
    %v44 = vld [vmem:[%s0] sm:$0xff]
    %v45 = vpack.c.bf16 %v44, %v44
    %v46 = vld [vmem:[#allocation2] sm:$0xf]
    %v47 = vld [vmem:[#allocation2 + $0x4] sm:$0xf]
    %v48 = vld [vmem:[%s2] sm:$0x1]
    %v50 = vperm.slane %v48, 0
    %v54 = vunpack.c.l.b16 %v46
    %v55 = vunpack.c.l.b16 %v47
    %v56 = vpack.c.b16 %v55, %v54
    %vm58 = vcmask 130048
    %v60 = vsel %vm58, %v45, 0
    %62 = vmatpush.bf16.msra.mxu0 0
    %63 = vmatpush.bf16.msra.mxu0 0
    %64 = vmatpush.bf16.msra.mxu0 0
    %65 = vmatpush.bf16.msra.mxu0 0
    %66 = vmatpush.bf16.msra.mxu0 0
    %67 = vmatpush.bf16.msra.mxu0 0
    %68 = vmatpush.bf16.msra.mxu0 0
    %69 = vmatpush.bf16.msra.mxu0 %v56
    %70 = vmatmul.bf16.gmra.mxu0 %v60
    %v71 = vpop.f32.mrf.mxu0
    %v72 = vadd.f32 %v50, %v71
    %v73 = vpop.f32.mrf.mxu0
    %74 = vdwg.mxu0
    %v75 = vmax.f32 %v72, 0.0
    %v76 = vpack.c.bf16 %v75, %v75
    %v77 = vld [vmem:[%s3] sm:$0xf]
    %v78 = vld [vmem:[%s3 + $0x4] sm:$0xf]
    %v79 = vld [vmem:[%s3 + $0x8] sm:$0xf]
    %v80 = vld [vmem:[%s3 + $0xc] sm:$0xf]
    %v81 = vld [vmem:[%s3 + $0x10] sm:$0xf]
    %v82 = vld [vmem:[%s3 + $0x14] sm:$0xf]
    %v83 = vld [vmem:[%s3 + $0x18] sm:$0xf]
    %v84 = vld [vmem:[%s3 + $0x1c] sm:$0xf]
    %v85 = vld [vmem:[%s4] sm:$0x1]
    %v87 = vperm.slane %v85, 0
    %v97 = vunpack.c.l.b16 %v77
    %v98 = vunpack.c.l.b16 %v78
    %v99 = vunpack.c.l.b16 %v79
    %v100 = vunpack.c.l.b16 %v80
    %v101 = vunpack.c.l.b16 %v81
    %v102 = vunpack.c.l.b16 %v82
    %v103 = vunpack.c.l.b16 %v83
    %v104 = vunpack.c.l.b16 %v84
    %v105 = vpack.c.b16 %v98, %v97
    %v106 = vpack.c.b16 %v100, %v99
    %v107 = vpack.c.b16 %v102, %v101
    %v108 = vpack.c.b16 %v104, %v103
    %vm113 = vcmask 523264
    %v115 = vsel %vm113, %v76, 0
    %117 = vmatpush.bf16.msra.mxu0 0
    %118 = vmatpush.bf16.msra.mxu0 0
    %119 = vmatpush.bf16.msra.mxu0 0
    %120 = vmatpush.bf16.msra.mxu0 0
    %121 = vmatpush.bf16.msra.mxu0 %v108
    %122 = vmatpush.bf16.msra.mxu0 %v107
    %123 = vmatpush.bf16.msra.mxu0 %v106
    %124 = vmatpush.bf16.msra.mxu0 %v105
    %125 = vmatmul.bf16.gmra.mxu0 %v115
    %v126 = vpop.f32.mrf.mxu0
    %v127 = vadd.f32 %v87, %v126
    %v128 = vpop.f32.mrf.mxu0
    %129 = vdwg.mxu0
    %v130 = vmax.f32 %v127, 0.0
    %v131 = vpack.c.bf16 %v130, %v130
    %v132 = vld [vmem:[%s5] sm:$0xf]
    %v133 = vld [vmem:[%s5 + $0x4] sm:$0xf]
    %v134 = vld [vmem:[%s5 + $0x8] sm:$0xf]
    %v135 = vld [vmem:[%s5 + $0xc] sm:$0xf]
    %v136 = vld [vmem:[%s5 + $0x10] sm:$0xf]
    %v137 = vld [vmem:[%s5 + $0x14] sm:$0xf]
    %v138 = vld [vmem:[%s5 + $0x18] sm:$0xf]
    %v139 = vld [vmem:[%s5 + $0x1c] sm:$0xf]
    %v140 = vld [vmem:[%s6] sm:$0x1]
    %v142 = vperm.slane %v140, 0
    %v152 = vunpack.c.l.b16 %v132
    %v153 = vunpack.c.l.b16 %v133
    %v154 = vunpack.c.l.b16 %v134
    %v155 = vunpack.c.l.b16 %v135
    %v156 = vunpack.c.l.b16 %v136
    %v157 = vunpack.c.l.b16 %v137
    %v158 = vunpack.c.l.b16 %v138
    %v159 = vunpack.c.l.b16 %v139
    %v160 = vpack.c.b16 %v153, %v152
    %v161 = vpack.c.b16 %v155, %v154
    %v162 = vpack.c.b16 %v157, %v156
    %v163 = vpack.c.b16 %v159, %v158
    %v169 = vsel %vm113, %v131, 0
    %171 = vmatpush.bf16.msra.mxu0 0
    %172 = vmatpush.bf16.msra.mxu0 0
    %173 = vmatpush.bf16.msra.mxu0 0
    %174 = vmatpush.bf16.msra.mxu0 0
    %175 = vmatpush.bf16.msra.mxu0 %v163
    %176 = vmatpush.bf16.msra.mxu0 %v162
    %177 = vmatpush.bf16.msra.mxu0 %v161
    %178 = vmatpush.bf16.msra.mxu0 %v160
    %179 = vmatmul.bf16.gmra.mxu0 %v169
    %v180 = vpop.f32.mrf.mxu0
    %v181 = vadd.f32 %v142, %v180
    %v182 = vpop.f32.mrf.mxu0
    %183 = vdwg.mxu0
    %v184 = vlaneseq
    %v185 = vand.u32 %v184, 127
    %v186 = vmax.f32 %v181, -20.0
    %v187 = vmin.f32 %v186, 2.0
    %v188 = vmul.f32 %v187, 1.442695
    %v189 = vpow.pop %v188
    %vm190 = vcmp.ge.s32.totalorder %v185, 8
    %v191 = vsel %vm190, %v189, %v181
    %192 = vst.msk [vmem:[#allocation5] sm:$0xff] %vm58, %v191
    // Predicated region
    $region34: #{tpu_custom_call.1} parent=1 // pred_check
      _
    $region35: #{tpu_custom_call.1} parent=1 // pred_check_branch
      %194 = sbr.rel (0) target = $region37
    $region36: #{tpu_custom_call.1} parent=1 // pred_region
      %196 = vsyncadd [#allocation4], 0
      %s198 = sshll.u32 [#allocation5], 4
      %s199 = int_to_ptr.vmem [resolvable:$true] %s198
      %s200 = sshll.u32 %s7, 4
      %s201 = int_to_ptr.hbm [resolvable:$true] %s200
      %203 = dma.vmem_to_hbm [thread:$0]  %s199, 128, %s201, [#allocation4]
    $region37: #{tpu_custom_call.1} parent=1 // pred_fallthru
      _
    // Predicated region
    $region38: #{tpu_custom_call.1} parent=1 // pred_check
      _
    $region39: #{tpu_custom_call.1} parent=1 // pred_check_branch
      %205 = sbr.rel (0) target = $region41
    $region40: #{tpu_custom_call.1} parent=1 // pred_region
      %207 = dma.done [#allocation4], 128
    $region41: #{tpu_custom_call.1} parent=1 // pred_fallthru
      _
    %208 = vsyncpa [#allocation3], 1
    %209 = vsyncpa [#allocation4], 1

</llo_original>
